<compile_context>
chip_gen: v7x
topology: tpu7x:2x2x1
jax: 0.10.0
libtpu: 0.0.40
codegen_flags: <defaults>
</compile_context>

<pallas_src>
import jax
import jax.numpy as jnp
from jax.experimental import pallas as pl
from jax.experimental.pallas import tpu as pltpu


def classifications_kernel(x_ref, w1_ref, b1_ref, w3_ref, b3_ref, out_ref):
    # fc1 for the whole type-group in one (TB, D) x (D, G*H) MXU matmul.
    h = jnp.dot(x_ref[...], w1_ref[...], preferred_element_type=jnp.float32)
    h = jnp.maximum(h + b1_ref[...], 0.0)                  # bias + ReLU (VPU)
    # fc3: block-diagonal (G*H, 128) matmul -> lane-dense (TB, 128) result.
    w3 = w3_ref[0]
    s = jnp.dot(h.astype(w3.dtype), w3, preferred_element_type=jnp.float32)
    out_ref[...] = jax.nn.sigmoid(s + b3_ref[...])         # EUP exp


def _round_up(v, m):
    return ((v + m - 1) // m) * m


def _physical_vmem_bytes():
    """Physical VMEM per TensorCore (v5e/v6e: 128 MiB, v7x: 64 MiB)."""
    try:
        info = pltpu.get_tpu_info()
        for attr in ("vmem_capacity_bytes", "vmem_size_bytes", "vmem_bytes"):
            val = getattr(info, attr, None)
            if val:
                return int(val)
    except Exception:
        pass
    return 64 * 1024 * 1024  # conservative fallback: fits every generation


def classifications_forward(x, w1, b1, w3, b3, *, tb=None, compute_dtype=None):
    """x: (B, D); w1: (T, D, H); b1: (T, H); w3: (T, H); b3: (1, T) -> (B, T).

    compute_dtype: optional MXU input dtype (jnp.bfloat16 helps on v5e/v6e/v7x;
    a 1-byte fp8 dtype is accepted for x/w1 on v7x — fc3 then uses bf16).
    Accumulation is always f32.
    """
    B, D = x.shape
    T, D2, H = w1.shape
    assert D == D2

    TG = 128                                   # types per output lane-group
    n_groups = (T + TG - 1) // TG
    T_pad = n_groups * TG

    # --- wrapper-side layout plumbing (done once, outside the kernel) -------
    if n_groups == 1:
        cols = T * H                           # fc1 columns per group
        w1_g, b1_g, w3_g = w1, b1, w3
        eye = jnp.eye(T, TG, dtype=jnp.float32)
    else:
        cols = TG * H
        pad_t = T_pad - T
        w1_g = jnp.pad(w1, ((0, pad_t), (0, 0), (0, 0)))
        b1_g = jnp.pad(b1, ((0, pad_t), (0, 0)))
        w3_g = jnp.pad(w3, ((0, pad_t), (0, 0)))
        eye = jnp.eye(TG, dtype=jnp.float32)

    # fc1 weights as one (D, n_groups*cols) slab (type-major column order).
    w1_2d = jnp.transpose(w1_g, (1, 0, 2)).reshape(D, n_groups * cols)
    b1_2d = b1_g.reshape(1, n_groups * cols).astype(jnp.float32)
    # Per-group block-diagonal fc3 weights: w3_blk[g, tl*H + h, tl] = w3[g*TG+tl, h].
    gsz = cols // H
    w3_blk = (w3_g.reshape(n_groups, gsz, H)[:, :, :, None]
              * eye[None, :, None, :]).reshape(n_groups, cols, TG)
    b3_pad = jnp.zeros((1, T_pad), jnp.float32).at[:, :T].set(b3.astype(jnp.float32))

    # --- optional reduced-precision MXU inputs (f32 accumulate) -------------
    if compute_dtype is not None:
        x = x.astype(compute_dtype)
        w1_2d = w1_2d.astype(compute_dtype)
        # fc3 consumes the f32 fc1 activation; fp8 is too lossy there, so the
        # second matmul falls back to bf16 when compute_dtype is 1-byte.
        mm2_dtype = (compute_dtype if jnp.dtype(compute_dtype).itemsize >= 2
                     else jnp.bfloat16)
        w3_blk = w3_blk.astype(mm2_dtype)

    # --- batch tiling --------------------------------------------------------
    # Sublane packing: f32 -> 8, bf16 -> 16, fp8/int8 -> 32.
    align = {1: 32, 2: 16}.get(jnp.dtype(x.dtype).itemsize, 8)
    if tb is None:
        tb = 256
    tb = max(align, (int(tb) // align) * align)
    b_ceil = _round_up(B, align)
    tb = min(tb, b_ceil)
    # Keep >= 2 batch steps when the batch allows, so both v7x TCs get work.
    if tb >= b_ceil and b_ceil >= 2 * align:
        tb = _round_up(b_ceil // 2, align)

    # --- generation-aware VMEM budget (85% of physical, double-buffered) ----
    budget = int(_physical_vmem_bytes() * 0.85)

    def footprint(t):
        return (2 * t * D * jnp.dtype(x.dtype).itemsize              # x tile
                + 2 * D * cols * jnp.dtype(w1_2d.dtype).itemsize     # w1 group
                + 2 * cols * 4                                       # b1 group
                + 2 * cols * TG * jnp.dtype(w3_blk.dtype).itemsize   # w3 group
                + 2 * TG * 4                                         # b3 group
                + 2 * t * cols * 4                                   # fc1 act (+cast)
                + 2 * t * TG * 4)                                    # out tile

    while tb > align and footprint(tb) > budget:
        tb = max(align, ((tb // 2) // align) * align)

    b_pad = _round_up(B, tb)
    if b_pad != B:
        x = jnp.pad(x, ((0, b_pad - B), (0, 0)))
    grid = (b_pad // tb, n_groups)

    vmem_limit = int(min(budget, max(32 * 1024 * 1024, 2 * footprint(tb))))

    isz = lambda a: a.size * a.dtype.itemsize
    cost = pl.CostEstimate(
        flops=2 * b_pad * D * n_groups * cols + 2 * b_pad * n_groups * cols * TG,
        transcendentals=b_pad * T_pad,
        bytes_accessed=(isz(x) + isz(w1_2d) + isz(b1_2d) + isz(w3_blk)
                        + isz(b3_pad) + b_pad * T_pad * 4),
    )

    out = pl.pallas_call(
        classifications_kernel,
        out_shape=jax.ShapeDtypeStruct((b_pad, T_pad), jnp.float32),
        grid=grid,
        in_specs=[
            pl.BlockSpec((tb, D), lambda i, g: (i, 0)),            # x: streamed per tile
            pl.BlockSpec((D, cols), lambda i, g: (0, g)),          # w1 group (VMEM-resident)
            pl.BlockSpec((1, cols), lambda i, g: (0, g)),          # b1 group
            pl.BlockSpec((1, cols, TG), lambda i, g: (g, 0, 0)),   # w3 group (block-diagonal)
            pl.BlockSpec((1, TG), lambda i, g: (0, g)),            # b3 group (padded)
        ],
        out_specs=pl.BlockSpec((tb, TG), lambda i, g: (i, g)),
        compiler_params=pltpu.CompilerParams(
            dimension_semantics=("parallel", "parallel"),
            vmem_limit_bytes=vmem_limit,
        ),
        cost_estimate=cost,
    )(x, w1_2d, b1_2d, w3_blk, b3_pad)

    return out[:B, :T]


def reference_forward(x, w1, b1, w3, b3):
    # Pure-JAX reference mirroring the PyTorch per-type MLP loop.
    h = jnp.maximum(jnp.einsum("bd,tdh->tbh", x, w1) + b1[:, None, :], 0.0)
    s = jnp.einsum("tbh,th->tb", h, w3) + b3[0][:, None]
    return jax.nn.sigmoid(s).T                                   # (T, B) -> (B, T)


if __name__ == "__main__":
    key = jax.random.PRNGKey(0)
    kx, k1, k2, k3, k4 = jax.random.split(key, 5)

    # Small shapes consistent with the module: x is (batch, data_dim).
    batch, data_dim, hidden_dim, types = 64, 32, 32, 4
    scale1 = 1.0 / jnp.sqrt(jnp.float32(data_dim))
    scale3 = 1.0 / jnp.sqrt(jnp.float32(hidden_dim))

    x = jax.random.normal(kx, (batch, data_dim), dtype=jnp.float32)
    # Deterministic synthetic parameters (PyTorch-Linear shapes, pre-transposed
    # to "x @ W" layout). fc2 is unused by forward and therefore not created.
    w1 = jax.random.uniform(k1, (types, data_dim, hidden_dim), jnp.float32,
                            -scale1, scale1)
    b1 = jax.random.uniform(k2, (types, hidden_dim), jnp.float32, -scale1, scale1)
    w3 = jax.random.uniform(k3, (types, hidden_dim), jnp.float32, -scale3, scale3)
    b3 = jax.random.uniform(k4, (1, types), jnp.float32, -scale3, scale3)

    ref = reference_forward(x, w1, b1, w3, b3)

    # f32 path (default tiling -> 2-step batch grid, single type group).
    out = jax.block_until_ready(classifications_forward(x, w1, b1, w3, b3))
    assert out.shape == (batch, types), out.shape
    assert jnp.allclose(out, ref, atol=1e-5, rtol=1e-5), "f32 mismatch vs reference"

    # bf16 MXU inputs (x, w1 and the block-diagonal fc3 slab), f32 accumulate.
    out_bf16 = jax.block_until_ready(
        classifications_forward(x, w1, b1, w3, b3, compute_dtype=jnp.bfloat16))
    assert jnp.allclose(out_bf16, ref, atol=2e-2, rtol=2e-2), "bf16 mismatch vs reference"

    # Multi-group path (types > 128 -> type-group grid axis, tiled block-diag fc3).
    kx2, k5, k6, k7, k8 = jax.random.split(jax.random.PRNGKey(0), 5)
    B2, D2, H2, T2 = 32, 16, 8, 160
    x2 = jax.random.normal(kx2, (B2, D2), dtype=jnp.float32)
    w1b = jax.random.uniform(k5, (T2, D2, H2), jnp.float32, -0.25, 0.25)
    b1b = jax.random.uniform(k6, (T2, H2), jnp.float32, -0.25, 0.25)
    w3b = jax.random.uniform(k7, (T2, H2), jnp.float32, -0.35, 0.35)
    b3b = jax.random.uniform(k8, (1, T2), jnp.float32, -0.35, 0.35)
    ref2 = reference_forward(x2, w1b, b1b, w3b, b3b)
    out2 = jax.block_until_ready(classifications_forward(x2, w1b, b1b, w3b, b3b))
    assert out2.shape == (B2, T2), out2.shape
    assert jnp.allclose(out2, ref2, atol=1e-5, rtol=1e-5), "multi-group mismatch vs reference"

    print("KERNEL_OK")
</pallas_src>

<mosaic_0001>
module attributes {stable_mosaic.version = 11 : i64} {
  func.func @classifications_kernel(%arg0: i32, %arg1: i32, %arg2: memref<32x32xf32, #tpu.memory_space<vmem>>, %arg3: memref<32x128xf32, #tpu.memory_space<vmem>>, %arg4: memref<1x128xf32, #tpu.memory_space<vmem>>, %arg5: memref<1x128x128xf32, #tpu.memory_space<vmem>>, %arg6: memref<1x128xf32, #tpu.memory_space<vmem>>, %arg7: memref<32x128xf32, #tpu.memory_space<vmem>>) attributes {dimension_semantics = [#tpu.dimension_semantics<parallel>, #tpu.dimension_semantics<parallel>], iteration_bounds = array<i64: 2, 1>, scalar_prefetch = 0 : i64, scratch_operands = 0 : i64, tpu.core_type = #tpu.core_type<tc>, window_params = [{transform_indices = @transform_0, window_bounds = array<i64: 32, 32>}, {transform_indices = @transform_1, window_bounds = array<i64: 32, 128>}, {transform_indices = @transform_2, window_bounds = array<i64: 1, 128>}, {transform_indices = @transform_3, window_bounds = array<i64: 1, 128, 128>}, {transform_indices = @transform_4, window_bounds = array<i64: 1, 128>}, {transform_indices = @transform_5, window_bounds = array<i64: 32, 128>}]} {
    %c0 = arith.constant 0 : index
    %c0_0 = arith.constant 0 : index
    %0 = vector.load %arg2[%c0, %c0_0] : memref<32x32xf32, #tpu.memory_space<vmem>>, vector<32x32xf32>
    %c0_1 = arith.constant 0 : index
    %c0_2 = arith.constant 0 : index
    %1 = vector.load %arg3[%c0_1, %c0_2] : memref<32x128xf32, #tpu.memory_space<vmem>>, vector<32x128xf32>
    %cst = arith.constant dense<0.000000e+00> : vector<32x128xf32>
    %2 = tpu.matmul %0, %1, %cst {dimension_numbers = #tpu.dot_dimension_numbers<[1], [0], [0], [1], [0, 0, 1, 1], [], []>} : vector<32x32xf32>, vector<32x128xf32>, vector<32x128xf32> -> vector<32x128xf32>
    %c0_3 = arith.constant 0 : index
    %c0_4 = arith.constant 0 : index
    %3 = vector.load %arg4[%c0_3, %c0_4] : memref<1x128xf32, #tpu.memory_space<vmem>>, vector<1x128xf32>
    %4 = vector.broadcast %3 : vector<1x128xf32> to vector<32x128xf32>
    %5 = arith.addf %2, %4 : vector<32x128xf32>
    %cst_5 = arith.constant 0.000000e+00 : f32
    %6 = vector.broadcast %cst_5 : f32 to vector<32x128xf32>
    %7 = arith.maximumf %5, %6 : vector<32x128xf32>
    %c0_6 = arith.constant 0 : index
    %c0_7 = arith.constant 0 : index
    %c0_8 = arith.constant 0 : index
    %8 = vector.load %arg5[%c0_6, %c0_7, %c0_8] : memref<1x128x128xf32, #tpu.memory_space<vmem>>, vector<1x128x128xf32>
    %9 = vector.shape_cast %8 : vector<1x128x128xf32> to vector<128x128xf32>
    %cst_9 = arith.constant dense<0.000000e+00> : vector<32x128xf32>
    %10 = tpu.matmul %7, %9, %cst_9 {dimension_numbers = #tpu.dot_dimension_numbers<[1], [0], [0], [1], [0, 0, 1, 1], [], []>} : vector<32x128xf32>, vector<128x128xf32>, vector<32x128xf32> -> vector<32x128xf32>
    %c0_10 = arith.constant 0 : index
    %c0_11 = arith.constant 0 : index
    %11 = vector.load %arg6[%c0_10, %c0_11] : memref<1x128xf32, #tpu.memory_space<vmem>>, vector<1x128xf32>
    %12 = vector.broadcast %11 : vector<1x128xf32> to vector<32x128xf32>
    %13 = arith.addf %10, %12 : vector<32x128xf32>
    %14 = arith.negf %13 : vector<32x128xf32>
    %15 = math.exp %14 : vector<32x128xf32>
    %cst_12 = arith.constant 1.000000e+00 : f32
    %16 = vector.broadcast %cst_12 : f32 to vector<32x128xf32>
    %17 = arith.addf %16, %15 : vector<32x128xf32>
    %18 = arith.divf %16, %17 : vector<32x128xf32>
    %c0_13 = arith.constant 0 : index
    %c0_14 = arith.constant 0 : index
    %19 = vector.load %arg7[%c0_13, %c0_14] : memref<32x128xf32, #tpu.memory_space<vmem>>, vector<32x128xf32>
    tpu.vector_store %arg7[%c0_13, %c0_14], %18 {strides = array<i32>} : memref<32x128xf32, #tpu.memory_space<vmem>>, vector<32x128xf32>,
    return
  }
  func.func @transform_0(%arg0: i32, %arg1: i32) -> (i32, i32) {
    %c0_i32 = arith.constant 0 : i32
    %c0_i32_0 = arith.constant 0 : i32
    return %arg0, %c0_i32 : i32, i32
  }
  func.func @transform_1(%arg0: i32, %arg1: i32) -> (i32, i32) {
    %c0_i32 = arith.constant 0 : i32
    %c0_i32_0 = arith.constant 0 : i32
    return %c0_i32, %arg1 : i32, i32
  }
  func.func @transform_2(%arg0: i32, %arg1: i32) -> (i32, i32) {
    %c0_i32 = arith.constant 0 : i32
    %c0_i32_0 = arith.constant 0 : i32
    return %c0_i32, %arg1 : i32, i32
  }
  func.func @transform_3(%arg0: i32, %arg1: i32) -> (i32, i32, i32) {
    %c0_i32 = arith.constant 0 : i32
    %c0_i32_0 = arith.constant 0 : i32
    %c0_i32_1 = arith.constant 0 : i32
    return %arg1, %c0_i32, %c0_i32_0 : i32, i32, i32
  }
  func.func @transform_4(%arg0: i32, %arg1: i32) -> (i32, i32) {
    %c0_i32 = arith.constant 0 : i32
    %c0_i32_0 = arith.constant 0 : i32
    return %c0_i32, %arg1 : i32, i32
  }
  func.func @transform_5(%arg0: i32, %arg1: i32) -> (i32, i32) {
    %c0_i32 = arith.constant 0 : i32
    return %arg0, %arg1 : i32, i32
  }
}

</mosaic_0001>

<llo_original>
// kernel: tpu_custom_call.1
$region0: #{tpu_custom_call.1}
  #allocation0 [shape = 'u32[]', space=smem, size = 0x4, offset = 0x4, fixed_abs, tag = 'smem constant byte address 0x4 - core index']
  #allocation1 [shape = 'u32[144,128]{1,0:T(1,128)}', space=vmem, size = 0x12000, scoped, tag = 'internal scratch']
  %s0 = inlined_call_operand.vmem [shape: f32[64,32], index: 0, kind: input, shape index: {}]
  %s1 = inlined_call_operand.vmem [shape: f32[32,128], index: 1, kind: input, shape index: {}]
  %s2 = inlined_call_operand.vmem [shape: f32[1,128], index: 2, kind: input, shape index: {}]
  %s3 = inlined_call_operand.hbm [shape: f32[1,128,128], index: 3, kind: input, shape index: {}]
  %s4 = inlined_call_operand.vmem [shape: f32[1,128], index: 4, kind: input, shape index: {}]
  %s5 = inlined_call_operand.hbm [shape: f32[64,128], index: 5, kind: output, shape index: {}]
  %s6 = sld [smem:[#allocation0]]
  $region57: #{tpu_custom_call.1} parent=0
    _
  %s8 = ssub.s32 1, %s6
  %s9 = scalar_select 0, %s8, %s6
  $region1: #{tpu_custom_call.1} parent=0
    #allocation2 [shape = 'u8[65536]{0}', space=vmem, size = 0x10000, scoped, tag = 'input window, operand 3, single buffered']
    #allocation3 [shape = 's32[2]{0}', space=sflag, size = 0x8, scoped, tag = 'scoped memory for tpu_custom_call.1']
    #allocation4 [shape = 's32[2]{0}', space=sflag, size = 0x8, scoped, tag = 'scoped memory for tpu_custom_call.1']
    #allocation5 [shape = 'u8[32768]{0}', space=vmem, size = 0x8000, scoped, tag = 'output window, operand 0']
    %10 = vsyncpa [#allocation3], 0
    %11 = vsyncpa [#allocation4], 0
    %s12 = scalar_lea.sflag [#allocation4], 1
    %13 = vsyncpa %s12, 0
    loop: start=0, step=1, limit=4
    $region2: #{tpu_custom_call.1} parent=1 // loop_pre_header
      _
    $region3: #{tpu_custom_call.1} parent=1 // loop_header
      %s15 = sphi 0, %s19
      %p16 = scmp.ge.s32.totalorder %s15, 4
      %s22 = sphi 0, %s34
      %s23 = sphi 0, %s30
      %s24 = sphi 0, %s22
      %s25 = sphi 0, %s23
      %s26 = sphi 0, %s24
      %s27 = sphi 0, %s25
      %s37 = sphi 0, %s39
      %s40 = sphi 0, %s37
      %s41 = sphi 0, %s40
      %s57 = sphi 0, %s41
      %s63 = sphi 0, %s65
      %s66 = sphi 0, %s63
      %s67 = sphi 0, %s66
      %s83 = sphi 0, %s67
      %s89 = sphi 0, %s91
      %s92 = sphi 0, %s89
      %s93 = sphi 0, %s92
      %s109 = sphi 0, %s93
      %s115 = sphi 0, %s117
      %s118 = sphi 0, %s115
      %s119 = sphi 0, %s118
      %s135 = sphi 0, %s119
      %s141 = sphi 0, %s143
      %s144 = sphi 0, %s141
      %s145 = sphi 0, %s144
      %s161 = sphi 0, %s145
      %s169 = sphi 0, %s171
      %s172 = sphi 0, %s169
      %s173 = sphi 0, %s172
      %s189 = sphi 0, %s173
    $region4: #{tpu_custom_call.1} parent=1 // loop_header_branch
      %18 = sbr.rel (%p16) target = $region8
    $region5: #{tpu_custom_call.1} parent=1 // loop_body
      %s20 = ssub.s32 %s15, 1
      %s21 = ssub.s32 %s15, 2
      %s28 = sadd.s32 1, %s23
      %p29 = scmp.ge.s32.totalorder %s28, 1
      %s30 = scalar_select %p29, 0, %s28
      %s31 = sadd.s32 1, %s22
      %s32 = scalar_select %p29, %s31, %s22
      %p33 = scmp.ge.s32.totalorder %s32, 2
      %s34 = scalar_select %p33, 0, %s32
      %s35 = ssub.s32 %s22, %s34
      %p36 = scmp.eq.s32.totalorder %s35, 0
      %s38 = sadd.s32 %s37, 1
      %s39 = scalar_select %p36, %s37, %s38
      %p42 = pneg %p36
      %p43 = scmp.eq.s32.totalorder %s15, 1
      %p44 = por %p42, %p43
      %p45 = scmp.ne.s32.totalorder %s37, %s40
      %p46 = scmp.eq.s32.totalorder %s15, 0
      %p47 = por %p45, %p46
      %p48 = scmp.ne.s32.totalorder %s37, %s40
      %p49 = scmp.eq.s32.totalorder %s20, 1
      %p50 = por %p48, %p49
      %p51 = scmp.ne.s32.totalorder %s40, %s41
      %p52 = scmp.eq.s32.totalorder %s20, 0
      %p53 = por %p51, %p52
      %p54 = scmp.ne.s32.totalorder %s40, %s41
      %p55 = scmp.eq.s32.totalorder %s21, 1
      %p56 = por %p54, %p55
      %p58 = scmp.ne.s32.totalorder %s41, %s57
      %p59 = scmp.eq.s32.totalorder %s21, 0
      %p60 = por %p58, %p59
      %s61 = ssub.s32 %s23, %s30
      %p62 = scmp.eq.s32.totalorder %s61, 0
      %s64 = sadd.s32 %s63, 1
      %s65 = scalar_select %p62, %s63, %s64
      %p68 = pneg %p62
      %p69 = scmp.eq.s32.totalorder %s15, 1
      %p70 = por %p68, %p69
      %p71 = scmp.ne.s32.totalorder %s63, %s66
      %p72 = scmp.eq.s32.totalorder %s15, 0
      %p73 = por %p71, %p72
      %p74 = scmp.ne.s32.totalorder %s63, %s66
      %p75 = scmp.eq.s32.totalorder %s20, 1
      %p76 = por %p74, %p75
      %p77 = scmp.ne.s32.totalorder %s66, %s67
      %p78 = scmp.eq.s32.totalorder %s20, 0
      %p79 = por %p77, %p78
      %p80 = scmp.ne.s32.totalorder %s66, %s67
      %p81 = scmp.eq.s32.totalorder %s21, 1
      %p82 = por %p80, %p81
      %p84 = scmp.ne.s32.totalorder %s67, %s83
      %p85 = scmp.eq.s32.totalorder %s21, 0
      %p86 = por %p84, %p85
      %s87 = ssub.s32 %s23, %s30
      %p88 = scmp.eq.s32.totalorder %s87, 0
      %s90 = sadd.s32 %s89, 1
      %s91 = scalar_select %p88, %s89, %s90
      %p94 = pneg %p88
      %p95 = scmp.eq.s32.totalorder %s15, 1
      %p96 = por %p94, %p95
      %p97 = scmp.ne.s32.totalorder %s89, %s92
      %p98 = scmp.eq.s32.totalorder %s15, 0
      %p99 = por %p97, %p98
      %p100 = scmp.ne.s32.totalorder %s89, %s92
      %p101 = scmp.eq.s32.totalorder %s20, 1
      %p102 = por %p100, %p101
      %p103 = scmp.ne.s32.totalorder %s92, %s93
      %p104 = scmp.eq.s32.totalorder %s20, 0
      %p105 = por %p103, %p104
      %p106 = scmp.ne.s32.totalorder %s92, %s93
      %p107 = scmp.eq.s32.totalorder %s21, 1
      %p108 = por %p106, %p107
      %p110 = scmp.ne.s32.totalorder %s93, %s109
      %p111 = scmp.eq.s32.totalorder %s21, 0
      %p112 = por %p110, %p111
      %s113 = ssub.s32 %s23, %s30
      %p114 = scmp.eq.s32.totalorder %s113, 0
      %s116 = sadd.s32 %s115, 1
      %s117 = scalar_select %p114, %s115, %s116
      %p120 = pneg %p114
      %p121 = scmp.eq.s32.totalorder %s15, 1
      %p122 = por %p120, %p121
      %p123 = scmp.ne.s32.totalorder %s115, %s118
      %p124 = scmp.eq.s32.totalorder %s15, 0
      %p125 = por %p123, %p124
      %p126 = scmp.ne.s32.totalorder %s115, %s118
      %p127 = scmp.eq.s32.totalorder %s20, 1
      %p128 = por %p126, %p127
      %p129 = scmp.ne.s32.totalorder %s118, %s119
      %p130 = scmp.eq.s32.totalorder %s20, 0
      %p131 = por %p129, %p130
      %p132 = scmp.ne.s32.totalorder %s118, %s119
      %p133 = scmp.eq.s32.totalorder %s21, 1
      %p134 = por %p132, %p133
      %p136 = scmp.ne.s32.totalorder %s119, %s135
      %p137 = scmp.eq.s32.totalorder %s21, 0
      %p138 = por %p136, %p137
      %s139 = ssub.s32 %s23, %s30
      %p140 = scmp.eq.s32.totalorder %s139, 0
      %s142 = sadd.s32 %s141, 1
      %s143 = scalar_select %p140, %s141, %s142
      %p146 = pneg %p140
      %p147 = scmp.eq.s32.totalorder %s15, 1
      %p148 = por %p146, %p147
      %p149 = scmp.ne.s32.totalorder %s141, %s144
      %p150 = scmp.eq.s32.totalorder %s15, 0
      %p151 = por %p149, %p150
      %p152 = scmp.ne.s32.totalorder %s141, %s144
      %p153 = scmp.eq.s32.totalorder %s20, 1
      %p154 = por %p152, %p153
      %p155 = scmp.ne.s32.totalorder %s144, %s145
      %p156 = scmp.eq.s32.totalorder %s20, 0
      %p157 = por %p155, %p156
      %p158 = scmp.ne.s32.totalorder %s144, %s145
      %p159 = scmp.eq.s32.totalorder %s21, 1
      %p160 = por %p158, %p159
      %p162 = scmp.ne.s32.totalorder %s145, %s161
      %p163 = scmp.eq.s32.totalorder %s21, 0
      %p164 = por %p162, %p163
      %s165 = ssub.s32 %s22, %s34
      %s166 = ssub.s32 %s23, %s30
      %s167 = sor.u32 %s165, %s166
      %p168 = scmp.eq.s32.totalorder %s167, 0
      %s170 = sadd.s32 %s169, 1
      %s171 = scalar_select %p168, %s169, %s170
      %p174 = pneg %p168
      %p175 = scmp.eq.s32.totalorder %s15, 1
      %p176 = por %p174, %p175
      %p177 = scmp.ne.s32.totalorder %s169, %s172
      %p178 = scmp.eq.s32.totalorder %s15, 0
      %p179 = por %p177, %p178
      %p180 = scmp.ne.s32.totalorder %s169, %s172
      %p181 = scmp.eq.s32.totalorder %s20, 1
      %p182 = por %p180, %p181
      %p183 = scmp.ne.s32.totalorder %s172, %s173
      %p184 = scmp.eq.s32.totalorder %s20, 0
      %p185 = por %p183, %p184
      %p186 = scmp.ne.s32.totalorder %s172, %s173
      %p187 = scmp.eq.s32.totalorder %s21, 1
      %p188 = por %p186, %p187
      %p190 = scmp.ne.s32.totalorder %s173, %s189
      %p191 = scmp.eq.s32.totalorder %s21, 0
      %p192 = por %p190, %p191
      %p193 = scmp.le.s32.totalorder 1, %s15
      %p194 = scmp.lt.s32.totalorder %s15, 3
      %p195 = pnand %p193, %p194
      %p196 = pneg %p195
      // Predicated region
      $region9: #{tpu_custom_call.1} parent=5 // pred_check
        _
      $region10: #{tpu_custom_call.1} parent=5 // pred_check_branch
        %198 = sbr.rel (%p195) target = $region12
      $region11: #{tpu_custom_call.1} parent=5 // pred_region
        %s199 = ssub.s32 %s15, 1
        // Predicated region
        $region13: #{tpu_custom_call.1} parent=11 // pred_check
          %p200 = pneg %p79
        $region14: #{tpu_custom_call.1} parent=11 // pred_check_branch
          %202 = sbr.rel (%p200) target = $region16
        $region15: #{tpu_custom_call.1} parent=11 // pred_region
          %p203 = scmp.lt.s32.totalorder %s25, 0
          %s204 = scalar_select %p203, %s25, 0
          %s205 = smul.addr %s204, 8
          %s206 = scalar_lea.vmem %s1, %s205
        $region16: #{tpu_custom_call.1} parent=11 // pred_fallthru
          _
        // Predicated region
        $region17: #{tpu_custom_call.1} parent=11 // pred_check
          %p207 = pneg %p105
        $region18: #{tpu_custom_call.1} parent=11 // pred_check_branch
          %209 = sbr.rel (%p207) target = $region20
        $region19: #{tpu_custom_call.1} parent=11 // pred_region
          %p210 = scmp.lt.s32.totalorder %s25, 0
          %s211 = scalar_select %p210, %s25, 0
          %s212 = scalar_lea.vmem %s2, %s211
        $region20: #{tpu_custom_call.1} parent=11 // pred_fallthru
          _
        // Predicated region
        $region21: #{tpu_custom_call.1} parent=11 // pred_check
          %p213 = pneg %p131
        $region22: #{tpu_custom_call.1} parent=11 // pred_check_branch
          %215 = sbr.rel (%p213) target = $region24
        $region23: #{tpu_custom_call.1} parent=11 // pred_region
          %s217 = ssub.s32 2048, 2048
          %218 = vsyncadd [#allocation3], %s217
          %s219 = smul.addr %s25, 16
          %s220 = smul.addr %s219, 128
          %s221 = scalar_lea.hbm %s3, %s220
          %s222 = sshll.u32 [#allocation2], 4
          %s223 = int_to_ptr.vmem [resolvable:$true] %s222
          %228 = dma.hbm_to_vmem [thread:$0]  %s221, 2048, %s223, [#allocation3], 128, 128, 8
        $region24: #{tpu_custom_call.1} parent=11 // pred_fallthru
          _
        // Predicated region
        $region25: #{tpu_custom_call.1} parent=11 // pred_check
          %p229 = pneg %p157
        $region26: #{tpu_custom_call.1} parent=11 // pred_check_branch
          %231 = sbr.rel (%p229) target = $region28
        $region27: #{tpu_custom_call.1} parent=11 // pred_region
          %p232 = scmp.lt.s32.totalorder %s25, 0
          %s233 = scalar_select %p232, %s25, 0
          %s234 = scalar_lea.vmem %s4, %s233
        $region28: #{tpu_custom_call.1} parent=11 // pred_fallthru
          _
      $region12: #{tpu_custom_call.1} parent=5 // pred_fallthru
        _
      %p235 = scmp.lt.s32.totalorder %s15, 2
      // Predicated region
      $region29: #{tpu_custom_call.1} parent=5 // pred_check
        %p236 = pneg %p235
      $region30: #{tpu_custom_call.1} parent=5 // pred_check_branch
        %238 = sbr.rel (%p236) target = $region32
      $region31: #{tpu_custom_call.1} parent=5 // pred_region
        // Predicated region
        $region33: #{tpu_custom_call.1} parent=31 // pred_check
          %p239 = pneg %p47
        $region34: #{tpu_custom_call.1} parent=31 // pred_check_branch
          %241 = sbr.rel (%p239) target = $region36
        $region35: #{tpu_custom_call.1} parent=31 // pred_region
          %s242 = smul.u32 4, %s22
          %p243 = scmp.lt.s32.totalorder %s242, 7
          %s244 = scalar_select %p243, %s242, 7
          %s245 = smul.addr %s244, 8
          %s246 = scalar_lea.vmem %s0, %s245
          %s247 = smul.u32 4, %s22
        $region36: #{tpu_custom_call.1} parent=31 // pred_fallthru
          _
      $region32: #{tpu_custom_call.1} parent=5 // pred_fallthru
        _
      %p248 = scmp.le.s32.totalorder 1, %s15
      %p249 = scmp.lt.s32.totalorder %s15, 3
      %p250 = pnand %p248, %p249
      %p251 = pneg %p250
      // Predicated region
      $region37: #{tpu_custom_call.1} parent=5 // pred_check
        _
      $region38: #{tpu_custom_call.1} parent=5 // pred_check_branch
        %253 = sbr.rel (%p250) target = $region40
      $region39: #{tpu_custom_call.1} parent=5 // pred_region
        %s254 = ssub.s32 %s15, 1
        // Predicated region
        $region41: #{tpu_custom_call.1} parent=39 // pred_check
          %p255 = pneg %p131
        $region42: #{tpu_custom_call.1} parent=39 // pred_check_branch
          %257 = sbr.rel (%p255) target = $region44
        $region43: #{tpu_custom_call.1} parent=39 // pred_region
          %258 = dma.done [#allocation3], 2048
        $region44: #{tpu_custom_call.1} parent=39 // pred_fallthru
          _
        %s259 = smul.u32 4, %s24
        %p260 = scmp.lt.s32.totalorder %s259, 7
        %s261 = scalar_select %p260, %s259, 7
        %s262 = smul.addr %s261, 8
        %s263 = scalar_lea.vmem %s0, %s262
        %p264 = pneg %p53
        %p265 = pneg %p50
        %p266 = scmp.lt.s32.totalorder %s25, 0
        %s267 = scalar_select %p266, %s25, 0
        %s268 = smul.addr %s267, 8
        %s269 = scalar_lea.vmem %s1, %s268
        %p270 = pneg %p79
        %p271 = pneg %p76
        %p272 = scmp.lt.s32.totalorder %s25, 0
        %s273 = scalar_select %p272, %s25, 0
        %s274 = scalar_lea.vmem %s2, %s273
        %p275 = pneg %p105
        %p276 = pneg %p102
        %p277 = pneg %p131
        %p278 = pneg %p128
        %p279 = scmp.lt.s32.totalorder %s25, 0
        %s280 = scalar_select %p279, %s25, 0
        %s281 = scalar_lea.vmem %s4, %s280
        %p282 = pneg %p157
        %p283 = pneg %p154
        %p284 = pneg %p185
        %p285 = pneg %p182
        %s286 = sand.u32 %s172, 1
        %s287 = scalar_lea.sflag [#allocation4], %s286
        %s288 = sand.u32 %s172, 1
        %s289 = smul.addr %s288, 32
        %s290 = scalar_lea.vmem [#allocation5], %s289
        %s291 = smul.u32 4, %s24
        %p292 = scmp.lt.s32.totalorder %s291, 7
        %s293 = scalar_select %p292, %s291, 7
        %s294 = smul.addr %s293, 8
        %s295 = scalar_lea.vmem %s0, %s294
        %s296 = smul.u32 4, %s24
        %p297 = scmp.lt.s32.totalorder %s25, 0
        %s298 = scalar_select %p297, %s25, 0
        %s299 = smul.addr %s298, 8
        %s300 = scalar_lea.vmem %s1, %s299
        %p301 = scmp.lt.s32.totalorder %s25, 0
        %s302 = scalar_select %p301, %s25, 0
        %s303 = scalar_lea.vmem %s2, %s302
        %p304 = scmp.lt.s32.totalorder %s25, 0
        %s305 = scalar_select %p304, %s25, 0
        %s306 = scalar_lea.vmem %s4, %s305
        %s307 = smul.u32 4, %s24
        %v308 = vld [vmem:[%s295] sm:$0xff]
        %v309 = vld [vmem:[%s295 + $0x8] sm:$0xff]
        %v310 = vld [vmem:[%s295 + $0x10] sm:$0xff]
        %v311 = vld [vmem:[%s295 + $0x18] sm:$0xff]
        %v312 = vld [vmem:[%s300] sm:$0xff]
        %v313 = vld [vmem:[%s300 + $0x8] sm:$0xff]
        %v314 = vld [vmem:[%s300 + $0x10] sm:$0xff]
        %v315 = vld [vmem:[%s300 + $0x18] sm:$0xff]
        %v316 = vld [vmem:[%s303] sm:$0x1]
        %v318 = vlaneseq
        %v319 = vshrl.u32 %v318, 7
        %v320 = vsub.s32 0, %v319
        %v321 = vrot.slane %v316, %v320
        %vm323 = vcmask 261120
        %v325 = vsel %vm323, %v308, 0
        %v328 = vsel %vm323, %v309, 0
        %v331 = vsel %vm323, %v310, 0
        %v334 = vsel %vm323, %v311, 0
        %336 = vmatprep.subr.mxu0 0.0
        %337 = vmatpush1.msra.mxu0 %v312
        %338 = vmatprep.subr.mxu0 0.0
        %339 = vmatpush1.msra.mxu0 %v313
        %340 = vmatprep.subr.mxu0 0.0
        %341 = vmatpush1.msra.mxu0 %v314
        %342 = vmatprep.subr.mxu0 0.0
        %343 = vmatpush1.msra.mxu0 %v315
        %344 = vmatprep.subr.mxu0 0.0
        %345 = vmatpush1.msra.mxu0 0.0
        %346 = vmatprep.subr.mxu0 0.0
        %347 = vmatpush1.msra.mxu0 0.0
        %348 = vmatprep.subr.mxu0 0.0
        %349 = vmatpush1.msra.mxu0 0.0
        %350 = vmatprep.subr.mxu0 0.0
        %351 = vmatpush1.msra.mxu0 0.0
        %352 = vmatprep.subr.mxu0 0.0
        %353 = vmatpush1.msra.mxu0 0.0
        %354 = vmatprep.subr.mxu0 0.0
        %355 = vmatpush1.msra.mxu0 0.0
        %356 = vmatprep.subr.mxu0 0.0
        %357 = vmatpush1.msra.mxu0 0.0
        %358 = vmatprep.subr.mxu0 0.0
        %359 = vmatpush1.msra.mxu0 0.0
        %360 = vmatprep.subr.mxu0 0.0
        %361 = vmatpush1.msra.mxu0 0.0
        %362 = vmatprep.subr.mxu0 0.0
        %363 = vmatpush1.msra.mxu0 0.0
        %364 = vmatprep.subr.mxu0 0.0
        %365 = vmatpush1.msra.mxu0 0.0
        %366 = vmatprep.subr.mxu0 0.0
        %367 = vmatpush1.msra.mxu0 0.0
        %368 = vmatprep.subr.mxu0 0.0
        %369 = vmatpush1.msra.mxu0 0.0
        %370 = vmatprep.subr.mxu0 0.0
        %371 = vmatpush1.msra.mxu0 0.0
        %372 = vmatprep.subr.mxu0 0.0
        %373 = vmatpush1.msra.mxu0 0.0
        %374 = vmatprep.subr.mxu0 0.0
        %375 = vmatpush1.msra.mxu0 0.0
        %376 = vmatprep.subr.mxu0 0.0
        %377 = vmatpush1.msra.mxu0 0.0
        %378 = vmatprep.subr.mxu0 0.0
        %379 = vmatpush1.msra.mxu0 0.0
        %380 = vmatprep.subr.mxu0 0.0
        %381 = vmatpush1.msra.mxu0 0.0
        %382 = vmatprep.subr.mxu0 0.0
        %383 = vmatpush1.msra.mxu0 0.0
        %384 = vmatprep.subr.mxu0 0.0
        %385 = vmatpush1.msra.mxu0 0.0
        %386 = vmatprep.subr.mxu0 0.0
        %387 = vmatpush1.msra.mxu0 0.0
        %388 = vmatprep.subr.mxu0 0.0
        %389 = vmatpush1.msra.mxu0 0.0
        %390 = vmatprep.subr.mxu0 0.0
        %391 = vmatpush1.msra.mxu0 0.0
        %392 = vmatprep.subr.mxu0 0.0
        %393 = vmatpush1.msra.mxu0 0.0
        %394 = vmatprep.subr.mxu0 0.0
        %395 = vmatpush1.msra.mxu0 0.0
        %396 = vmatprep.subr.mxu0 0.0
        %397 = vmatpush1.msra.mxu0 0.0
        %398 = vmatprep.subr.mxu0 0.0
        %399 = vmatpush1.msra.mxu0 0.0
        %400 = vmatprep.mubr.f32.mxu0 0.0
        %401 = vmatmul.mubr.f32.gmra.mrb[0].mxu0 %v325
        %v402 = vpop.f32.mrb[0].mxu0
        %v403 = vadd.f32 %v321, %v402
        %v404 = vpop.f32.mrb[0].mxu0
        %405 = vmatprep.mubr.f32.mxu0 0.0
        %406 = vmatmul.mubr.f32.gmra.mrb[0].mxu0 %v328
        %v407 = vpop.f32.mrb[0].mxu0
        %v408 = vadd.f32 %v321, %v407
        %v409 = vpop.f32.mrb[0].mxu0
        %410 = vmatprep.mubr.f32.mxu0 0.0
        %411 = vmatmul.mubr.f32.gmra.mrb[0].mxu0 %v331
        %v412 = vpop.f32.mrb[0].mxu0
        %v413 = vadd.f32 %v321, %v412
        %v414 = vpop.f32.mrb[0].mxu0
        %415 = vmatprep.mubr.f32.mxu0 0.0
        %416 = vmatmul.mubr.f32.gmra.mrb[0].mxu0 %v334
        %v417 = vpop.f32.mrb[0].mxu0
        %v418 = vadd.f32 %v321, %v417
        %v419 = vpop.f32.mrb[0].mxu0
        %420 = vdwg.mxu0
        %v421 = vmax.f32 %v403, 0.0
        %v422 = vmax.f32 %v408, 0.0
        %v423 = vmax.f32 %v413, 0.0
        %v424 = vmax.f32 %v418, 0.0
        %v425 = vld [vmem:[#allocation2] sm:$0xff]
        %v426 = vld [vmem:[#allocation2 + $0x8] sm:$0xff]
        %v427 = vld [vmem:[#allocation2 + $0x10] sm:$0xff]
        %v428 = vld [vmem:[#allocation2 + $0x18] sm:$0xff]
        %v429 = vld [vmem:[#allocation2 + $0x20] sm:$0xff]
        %v430 = vld [vmem:[#allocation2 + $0x28] sm:$0xff]
        %v431 = vld [vmem:[#allocation2 + $0x30] sm:$0xff]
        %v432 = vld [vmem:[#allocation2 + $0x38] sm:$0xff]
        %v433 = vld [vmem:[#allocation2 + $0x40] sm:$0xff]
        %v434 = vld [vmem:[#allocation2 + $0x48] sm:$0xff]
        %v435 = vld [vmem:[#allocation2 + $0x50] sm:$0xff]
        %v436 = vld [vmem:[#allocation2 + $0x58] sm:$0xff]
        %v437 = vld [vmem:[#allocation2 + $0x60] sm:$0xff]
        %v438 = vld [vmem:[#allocation2 + $0x68] sm:$0xff]
        %v439 = vld [vmem:[#allocation2 + $0x70] sm:$0xff]
        %v440 = vld [vmem:[#allocation2 + $0x78] sm:$0xff]
        %v441 = vld [vmem:[%s306] sm:$0x1]
        %v443 = vlaneseq
        %v444 = vshrl.u32 %v443, 7
        %v445 = vsub.s32 0, %v444
        %v446 = vrot.slane %v441, %v445
        %448 = vmatprep.subr.mxu0 0.0
        %449 = vmatpush1.msra.mxu0 %v425
        %450 = vmatprep.subr.mxu0 0.0
        %451 = vmatpush1.msra.mxu0 %v426
        %452 = vmatprep.subr.mxu0 0.0
        %453 = vmatpush1.msra.mxu0 %v427
        %454 = vmatprep.subr.mxu0 0.0
        %455 = vmatpush1.msra.mxu0 %v428
        %456 = vmatprep.subr.mxu0 0.0
        %457 = vmatpush1.msra.mxu0 %v429
        %458 = vmatprep.subr.mxu0 0.0
        %459 = vmatpush1.msra.mxu0 %v430
        %460 = vmatprep.subr.mxu0 0.0
        %461 = vmatpush1.msra.mxu0 %v431
        %462 = vmatprep.subr.mxu0 0.0
        %463 = vmatpush1.msra.mxu0 %v432
        %464 = vmatprep.subr.mxu0 0.0
        %465 = vmatpush1.msra.mxu0 %v433
        %466 = vmatprep.subr.mxu0 0.0
        %467 = vmatpush1.msra.mxu0 %v434
        %468 = vmatprep.subr.mxu0 0.0
        %469 = vmatpush1.msra.mxu0 %v435
        %470 = vmatprep.subr.mxu0 0.0
        %471 = vmatpush1.msra.mxu0 %v436
        %472 = vmatprep.subr.mxu0 0.0
        %473 = vmatpush1.msra.mxu0 %v437
        %474 = vmatprep.subr.mxu0 0.0
        %475 = vmatpush1.msra.mxu0 %v438
        %476 = vmatprep.subr.mxu0 0.0
        %477 = vmatpush1.msra.mxu0 %v439
        %478 = vmatprep.subr.mxu0 0.0
        %479 = vmatpush1.msra.mxu0 %v440
        %480 = vmatprep.subr.mxu0 0.0
        %481 = vmatpush1.msra.mxu0 0.0
        %482 = vmatprep.subr.mxu0 0.0
        %483 = vmatpush1.msra.mxu0 0.0
        %484 = vmatprep.subr.mxu0 0.0
        %485 = vmatpush1.msra.mxu0 0.0
        %486 = vmatprep.subr.mxu0 0.0
        %487 = vmatpush1.msra.mxu0 0.0
        %488 = vmatprep.subr.mxu0 0.0
        %489 = vmatpush1.msra.mxu0 0.0
        %490 = vmatprep.subr.mxu0 0.0
        %491 = vmatpush1.msra.mxu0 0.0
        %492 = vmatprep.subr.mxu0 0.0
        %493 = vmatpush1.msra.mxu0 0.0
        %494 = vmatprep.subr.mxu0 0.0
        %495 = vmatpush1.msra.mxu0 0.0
        %496 = vmatprep.subr.mxu0 0.0
        %497 = vmatpush1.msra.mxu0 0.0
        %498 = vmatprep.subr.mxu0 0.0
        %499 = vmatpush1.msra.mxu0 0.0
        %500 = vmatprep.subr.mxu0 0.0
        %501 = vmatpush1.msra.mxu0 0.0
        %502 = vmatprep.subr.mxu0 0.0
        %503 = vmatpush1.msra.mxu0 0.0
        %504 = vmatprep.subr.mxu0 0.0
        %505 = vmatpush1.msra.mxu0 0.0
        %506 = vmatprep.subr.mxu0 0.0
        %507 = vmatpush1.msra.mxu0 0.0
        %508 = vmatprep.subr.mxu0 0.0
        %509 = vmatpush1.msra.mxu0 0.0
        %510 = vmatprep.subr.mxu0 0.0
        %511 = vmatpush1.msra.mxu0 0.0
        %512 = vmatprep.mubr.f32.mxu0 0.0
        %513 = vmatmul.mubr.f32.gmra.mrb[0].mxu0 %v421
        %v514 = vpop.f32.mrb[0].mxu0
        %v515 = vadd.f32 %v446, %v514
        %v516 = vpop.f32.mrb[0].mxu0
        %517 = vmatprep.mubr.f32.mxu0 0.0
        %518 = vmatmul.mubr.f32.gmra.mrb[0].mxu0 %v422
        %v519 = vpop.f32.mrb[0].mxu0
        %v520 = vadd.f32 %v446, %v519
        %v521 = vpop.f32.mrb[0].mxu0
        %522 = vmatprep.mubr.f32.mxu0 0.0
        %523 = vmatmul.mubr.f32.gmra.mrb[0].mxu0 %v423
        %v524 = vpop.f32.mrb[0].mxu0
        %v525 = vadd.f32 %v446, %v524
        %v526 = vpop.f32.mrb[0].mxu0
        %527 = vmatprep.mubr.f32.mxu0 0.0
        %528 = vmatmul.mubr.f32.gmra.mrb[0].mxu0 %v424
        %v529 = vpop.f32.mrb[0].mxu0
        %v530 = vadd.f32 %v446, %v529
        %v531 = vpop.f32.mrb[0].mxu0
        %532 = vdwg.mxu0
        %v533 = vxor.u32 %v515, 2147483648
        %v534 = vxor.u32 %v520, 2147483648
        %v535 = vxor.u32 %v525, 2147483648
        %v536 = vxor.u32 %v530, 2147483648
        %v537 = vmul.f32 %v533, 1.442695
        %v538 = vpow.pop %v537
        %v539 = vmul.f32 %v534, 1.442695
        %v540 = vpow.pop %v539
        %v541 = vmul.f32 %v535, 1.442695
        %v542 = vpow.pop %v541
        %v543 = vmul.f32 %v536, 1.442695
        %v544 = vpow.pop %v543
        %v545 = vadd.f32 %v538, 1.0
        %v546 = vadd.f32 %v540, 1.0
        %v547 = vadd.f32 %v542, 1.0
        %v548 = vadd.f32 %v544, 1.0
        %v549 = vrcp.pop %v545
        %v550 = vmul.f32 1.0, %v549
        %v551 = vrcp.pop %v546
        %v552 = vmul.f32 1.0, %v551
        %v553 = vrcp.pop %v547
        %v554 = vmul.f32 1.0, %v553
        %v555 = vrcp.pop %v548
        %v556 = vmul.f32 1.0, %v555
        %557 = vst [vmem:[%s290] sm:$0xff] %v550
        %558 = vst [vmem:[%s290 + $0x8] sm:$0xff] %v552
        %559 = vst [vmem:[%s290 + $0x10] sm:$0xff] %v554
        %560 = vst [vmem:[%s290 + $0x18] sm:$0xff] %v556
        %s561 = sand.u32 %s172, 1
        %s562 = scalar_lea.sflag [#allocation4], %s561
        %s563 = sand.u32 %s172, 1
        %s564 = smul.addr %s563, 32
        %s565 = scalar_lea.vmem [#allocation5], %s564
        // Predicated region
        $region45: #{tpu_custom_call.1} parent=39 // pred_check
          %p566 = pneg %p182
        $region46: #{tpu_custom_call.1} parent=39 // pred_check_branch
          %568 = sbr.rel (%p566) target = $region48
        $region47: #{tpu_custom_call.1} parent=39 // pred_region
          %s569 = smul.u32 4, %s24
          %s571 = ssub.s32 512, 512
          %572 = vsyncadd %s562, %s571
          %s573 = sadd.s32 %s25, %s569
          %s574 = smul.addr %s573, 128
          %s575 = scalar_lea.hbm %s5, %s574
          %s576 = sshll.u32 %s565, 4
          %s577 = int_to_ptr.vmem [resolvable:$true] %s576
          %582 = dma.vmem_to_hbm [thread:$0]  %s577, 512, %s575, %s562, 128, 128, 8
        $region48: #{tpu_custom_call.1} parent=39 // pred_fallthru
          _
      $region40: #{tpu_custom_call.1} parent=5 // pred_fallthru
        _
      %p583 = scmp.le.s32.totalorder 2, %s15
      // Predicated region
      $region49: #{tpu_custom_call.1} parent=5 // pred_check
        %p584 = pneg %p583
      $region50: #{tpu_custom_call.1} parent=5 // pred_check_branch
        %586 = sbr.rel (%p584) target = $region52
      $region51: #{tpu_custom_call.1} parent=5 // pred_region
        %s587 = ssub.s32 %s15, 2
        // Predicated region
        $region53: #{tpu_custom_call.1} parent=51 // pred_check
          %p588 = pneg %p188
        $region54: #{tpu_custom_call.1} parent=51 // pred_check_branch
          %590 = sbr.rel (%p588) target = $region56
        $region55: #{tpu_custom_call.1} parent=51 // pred_region
          %s591 = sand.u32 %s173, 1
          %s592 = scalar_lea.sflag [#allocation4], %s591
          %s593 = sand.u32 %s173, 1
          %s594 = smul.addr %s593, 32
          %s595 = scalar_lea.vmem [#allocation5], %s594
          %596 = dma.done %s592, 512
        $region56: #{tpu_custom_call.1} parent=51 // pred_fallthru
          _
      $region52: #{tpu_custom_call.1} parent=5 // pred_fallthru
        _
    $region6: #{tpu_custom_call.1} parent=1 // loop_footer
      %s19 = sadd.s32 1, %s15
    $region7: #{tpu_custom_call.1} parent=1 // loop_footer_branch
      %14 = sbr.rel target = $region3
    $region8: #{tpu_custom_call.1} parent=1 // loop_exit
      _
    %597 = vsyncpa [#allocation3], 1
    %s598 = scalar_lea.sflag [#allocation3], 1
    %599 = vsyncpa %s598, 1
    %600 = vsyncpa [#allocation4], 1
    %s601 = scalar_lea.sflag [#allocation4], 1
    %602 = vsyncpa %s601, 1

</llo_original>
